<compile_context>
chip_gen: v5e
topology: v5e:2x2
jax: 0.10.0
libtpu: 0.0.40
codegen_flags: <defaults>
</compile_context>

<pallas_src>
import numpy as np
import jax
import jax.numpy as jnp
from jax.experimental import pallas as pl
from jax.experimental.pallas import tpu as pltpu


# --------------------------------------------------------------------------
# pltpu.roll direction probe + helpers
# --------------------------------------------------------------------------

_ROLL_SIGN = None  # +1: pltpu.roll matches jnp.roll; -1: opposite convention.


def _probe_roll():
    """Resolve pltpu.roll's rotation direction once (must run outside jit)."""
    global _ROLL_SIGN
    if _ROLL_SIGN is not None:
        return

    def _k(x_ref, o_ref):
        o_ref[...] = pltpu.roll(x_ref[...], 1, axis=1)

    x = jnp.tile(jnp.arange(128, dtype=jnp.float32)[None, :], (8, 1))
    y = pl.pallas_call(
        _k,
        out_shape=jax.ShapeDtypeStruct((8, 128), jnp.float32),
        grid=(1,),
        in_specs=[pl.BlockSpec((8, 128), lambda i: (0, 0))],
        out_specs=pl.BlockSpec((8, 128), lambda i: (0, 0)),
    )(x)
    _ROLL_SIGN = 1 if float(y[0, 0]) == 127.0 else -1


def _roll_hi(x, delta, axis):
    """Rotate so content at index i moves to i+delta (== jnp.roll(x, delta))."""
    size = x.shape[axis]
    sign = _ROLL_SIGN if _ROLL_SIGN is not None else 1
    s = (sign * delta) % size
    if s == 0:
        return x
    return pltpu.roll(x, s, axis=axis)


def _roll_lo(x, delta, axis):
    """Rotate so out[m] = x[m + delta] (content moves to lower indices)."""
    return _roll_hi(x, -delta, axis)


def _pool2x2_sparse(y, row_stride):
    """2x2 / stride-2 max pool on a flat (C, lanes) tile.

    The pooled value of window (r, c) lands on lane (2r*row_stride + 2c) of the
    *input* layout; every other lane becomes don't-care (later gather matrices
    only read the valid lanes)."""
    m = jnp.maximum(y, _roll_lo(y, 1, axis=1))
    return jnp.maximum(m, _roll_lo(m, row_stride, axis=1))


# --------------------------------------------------------------------------
# Localization-network geometry + constant gather matrices (trace time, numpy)
# --------------------------------------------------------------------------

def _geometry(input_size):
    """Spatial sizes through the localization net (matches convNoutput)."""
    S = [input_size // 2]            # after the initial MaxPool2d(2, 2)
    P, Co = [], []
    for k, pad in ((5, 2), (5, 2), (3, 2)):
        p = S[-1] + 2 * pad          # ReplicationPad2d(pad)
        c = p - k + 1                # Conv2d(k, stride=1)
        P.append(p)
        Co.append(c)
        S.append(c // 2)             # MaxPool2d(2, 2)
    return S, P, Co


def _round_up(v, m=128):
    return (v + m - 1) // m * m


def _localization_consts(N, input_size):
    """Constant 0/1 gather matrices for the fused localization kernel.

    T[i]  : sparse-pooled activations of stage i-1  ->  stage i's
            ReplicationPad2d'ed, flattened (image, row, col) lane layout.
    sel   : final NCHW-flatten selector (sf*sf, Mp3, N) feeding the fc layer."""
    S, P, _ = _geometry(input_size)
    M0 = N * input_size * input_size
    Mp = [_round_up(N * p * p) for p in P]

    src = [(input_size * input_size, input_size, S[0]),
           (P[0] * P[0], P[0], S[1]),
           (P[1] * P[1], P[1], S[2])]
    n_src = [M0, Mp[0], Mp[1]]

    mats = []
    for i in range(3):
        img_stride, row_stride, pooled_s = src[i]
        dP, pad = P[i], 2
        T = np.zeros((n_src[i], Mp[i]), np.float32)
        for n in range(N):
            for rp in range(dP):
                r = min(max(rp - pad, 0), pooled_s - 1)
                for cp in range(dP):
                    c = min(max(cp - pad, 0), pooled_s - 1)
                    T[n * img_stride + 2 * r * row_stride + 2 * c,
                      n * dP * dP + rp * dP + cp] = 1.0
        mats.append(T)

    sf = S[-1]
    sel = np.zeros((sf * sf, Mp[2], N), np.float32)
    for n in range(N):
        for r in range(sf):
            for c in range(sf):
                sel[r * sf + c,
                    n * P[2] * P[2] + 2 * r * P[2] + 2 * c, n] = 1.0
    return mats, sel, S, P, Mp


# --------------------------------------------------------------------------
# Fused localization kernel (maxpool + 3 conv stages + fc + classifier)
# --------------------------------------------------------------------------

def _make_localization_kernel(N, input_size, S, P):
    ks = (5, 5, 3)
    sf = S[-1]

    def kernel(x_ref, t0_ref, t1_ref, t2_ref, sel_ref,
               w1_ref, b1_ref, w2_ref, b2_ref, w3_ref, b3_ref,
               fcw_ref, fcb_ref, clw_ref, clb_ref, out_ref):
        # Channel-major, lane-dense (C, N*H*W) view of the whole batch.
        h = jnp.concatenate([x_ref[n] for n in range(N)], axis=-1)
        # nn.MaxPool2d(2, 2) on the raw input (pooled values on even lanes).
        h = _pool2x2_sparse(h, input_size)

        t_refs = (t0_ref, t1_ref, t2_ref)
        w_refs = (w1_ref, w2_ref, w3_ref)
        b_refs = (b1_ref, b2_ref, b3_ref)
        for st in range(3):
            k, pw = ks[st], P[st]
            # ReplicationPad2d(2) + relayout of the sparse pooled values into
            # this stage's padded (C, N*pw*pw) layout: one constant-gather matmul.
            padded = jnp.dot(h.astype(jnp.bfloat16), t_refs[st][...],
                             preferred_element_type=jnp.float32)
            padded = padded.astype(jnp.bfloat16)
            # Direct convolution: one tiny (Cout, Cin) MXU matmul per (di, dj)
            # tap on XLU lane-rolled activations -- no im2col materialised.
            acc = None
            for di in range(k):
                for dj in range(k):
                    off = di * pw + dj
                    tap = padded if off == 0 else _roll_lo(padded, off, axis=1)
                    term = jnp.dot(w_refs[st][di * k + dj], tap,
                                   preferred_element_type=jnp.float32)
                    acc = term if acc is None else acc + term
            y = jnp.maximum(acc + b_refs[st][...], 0.0)   # conv bias + ReLU
            h = _pool2x2_sparse(y, pw)                    # MaxPool2d(2, 2)

        # View + Linear(out_numel, p3) + ReLU + Linear(p3, 6), fused.
        hid = None
        for s in range(sf * sf):
            z_s = jnp.dot(h, sel_ref[s], preferred_element_type=jnp.float32)
            t_s = jnp.dot(fcw_ref[s], z_s, preferred_element_type=jnp.float32)
            hid = t_s if hid is None else hid + t_s
        hid = jnp.maximum(hid + fcb_ref[...], 0.0)
        out_ref[...] = (jnp.dot(clw_ref[...], hid,
                                preferred_element_type=jnp.float32)
                        + clb_ref[...])

    return kernel


def _full_spec(shape):
    nd = len(shape)
    return pl.BlockSpec(shape, lambda i, _nd=nd: (0,) * _nd)


def _localization(prm, x_flat, N, input_size):
    """Runs the whole localization net in one pallas_call.  Returns theta^T (6, N)."""
    mats, sel, S, P, _ = _localization_consts(N, input_size)
    kernel = _make_localization_kernel(N, input_size, S, P)
    args = (
        x_flat,
        jnp.asarray(mats[0], jnp.bfloat16),
        jnp.asarray(mats[1], jnp.bfloat16),
        jnp.asarray(mats[2], jnp.bfloat16),
        jnp.asarray(sel, jnp.float32),
        prm["conv1_w"], prm["conv1_b"],
        prm["conv2_w"], prm["conv2_b"],
        prm["conv3_w"], prm["conv3_b"],
        prm["fc_w"], prm["fc_b"],
        prm["cls_w"], prm["cls_b"],
    )
    return pl.pallas_call(
        kernel,
        out_shape=jax.ShapeDtypeStruct((6, N), jnp.float32),
        grid=(1,),
        in_specs=[_full_spec(a.shape) for a in args],
        out_specs=_full_spec((6, N)),
        compiler_params=pltpu.CompilerParams(dimension_semantics=("arbitrary",)),
    )(*args)


# --------------------------------------------------------------------------
# grid_sample kernel (F.affine_grid + F.grid_sample, bilinear / zeros / AC=False)
# --------------------------------------------------------------------------

def _make_grid_sample_kernel(H, W, N):
    HW = H * W
    fW, fH = float(W), float(H)

    def kernel(theta_ref, x_ref, o_ref):
        n = pl.program_id(0)
        t00 = theta_ref[0 * N + n]
        t01 = theta_ref[1 * N + n]
        t02 = theta_ref[2 * N + n]
        t10 = theta_ref[3 * N + n]
        t11 = theta_ref[4 * N + n]
        t12 = theta_ref[5 * N + n]

        # Destination pixel coordinates as a (1, HW) lane vector.
        p = jax.lax.broadcasted_iota(jnp.int32, (1, HW), 1)
        row = (p // W).astype(jnp.float32)
        col = (p % W).astype(jnp.float32)

        # F.affine_grid base grid (align_corners=False).
        xb = (2.0 * col + 1.0) / fW - 1.0
        yb = (2.0 * row + 1.0) / fH - 1.0
        gx = t00 * xb + t01 * yb + t02
        gy = t10 * xb + t11 * yb + t12

        # F.grid_sample: bilinear, zeros padding, align_corners=False.
        ix = ((gx + 1.0) * fW - 1.0) * 0.5
        iy = ((gy + 1.0) * fH - 1.0) * 0.5
        ix = jnp.clip(ix, -2.0, fW + 1.0)   # insurance for extreme theta
        iy = jnp.clip(iy, -2.0, fH + 1.0)

        x0f = jnp.floor(ix)
        y0f = jnp.floor(iy)
        wx1 = ix - x0f
        wx0 = 1.0 - wx1
        wy1 = iy - y0f
        wy0 = 1.0 - wy1
        x0 = x0f.astype(jnp.int32)
        y0 = y0f.astype(jnp.int32)

        # Per-corner validity -> masked bilinear weights (zeros padding).
        vx0 = (x0 >= 0) & (x0 <= W - 1)
        vx1 = (x0 >= -1) & (x0 <= W - 2)
        vy0 = (y0 >= 0) & (y0 <= H - 1)
        vy1 = (y0 >= -1) & (y0 <= H - 2)
        w00 = jnp.where(vx0 & vy0, wx0 * wy0, 0.0)
        w10 = jnp.where(vx1 & vy0, wx1 * wy0, 0.0)
        w01 = jnp.where(vx0 & vy1, wx0 * wy1, 0.0)
        w11 = jnp.where(vx1 & vy1, wx1 * wy1, 0.0)

        # Transposed one-hot gather matrix S^T (src on sublanes, dst on lanes):
        # ONE compare builds the anchor one-hot; the +1 / +W / +W+1 corner
        # one-hots are sublane rolls (XLU) of it.  Wrap-aliased positions only
        # occur for out-of-bounds corners whose weight is already zero.
        anchor = jnp.mod(y0 * W + x0, HW)                      # (1, HW) int32
        q = jax.lax.broadcasted_iota(jnp.int32, (HW, HW), 0)   # src on sublanes
        base = jnp.where(q == anchor, 1.0, 0.0)                # (HW, HW)
        s_t = (base * w00
               + _roll_hi(base, 1, 0) * w10
               + _roll_hi(base, W, 0) * w01
               + _roll_hi(base, W + 1, 0) * w11)

        # Lane-dense output: (C, HW) = (C, HW) @ (HW, HW) on the MXU.
        o_ref[0] = jnp.dot(x_ref[0], s_t, preferred_element_type=jnp.float32)

    return kernel


def affine_grid_sample(x_flat, theta_t, N, C, H, W):
    """Equivalent of F.grid_sample(x, F.affine_grid(theta, x.size())).

    x_flat: (N, C, H*W);  theta_t: (6, N) -- theta component-major."""
    HW = H * W
    theta_flat = theta_t.reshape(6 * N)              # index = component*N + n
    return pl.pallas_call(
        _make_grid_sample_kernel(H, W, N),
        out_shape=jax.ShapeDtypeStruct((N, C, HW), jnp.float32),
        grid_spec=pltpu.PrefetchScalarGridSpec(
            num_scalar_prefetch=1,                    # theta -> SMEM scalars
            grid=(N,),
            in_specs=[pl.BlockSpec((1, C, HW), lambda n, th: (n, 0, 0))],
            out_specs=pl.BlockSpec((1, C, HW), lambda n, th: (n, 0, 0)),
        ),
        compiler_params=pltpu.CompilerParams(
            dimension_semantics=("parallel",)),       # one image per TC on v7x
    )(theta_flat, x_flat)


# --------------------------------------------------------------------------
# Parameter init (PyTorch default init; weights stored kernel-ready)
# --------------------------------------------------------------------------

def init_stn_params(key, input_channels, input_size, params):
    p0, p1, p2, p3 = params
    S, _, _ = _geometry(input_size)
    sf = S[-1]
    out_numel = p2 * sf * sf

    def uinit(k, shape, fan_in):
        bound = 1.0 / np.sqrt(fan_in)
        return jax.random.uniform(k, shape, jnp.float32, -bound, bound)

    def prep_conv(w):   # (Cout, Cin, k, k) -> (k*k, Cout, Cin), bf16 (MXU native)
        kk = w.shape[-1]
        return jnp.asarray(
            w.transpose(2, 3, 0, 1).reshape(kk * kk, w.shape[0], w.shape[1]),
            jnp.bfloat16)

    ks = jax.random.split(key, 8)
    conv1_w = uinit(ks[0], (p0, input_channels, 5, 5), input_channels * 25)
    conv2_w = uinit(ks[2], (p1, p0, 5, 5), p0 * 25)
    conv3_w = uinit(ks[4], (p2, p1, 3, 3), p1 * 9)
    fc_w = uinit(ks[6], (p3, out_numel), out_numel)

    return {
        "conv1_w": prep_conv(conv1_w),
        "conv1_b": uinit(ks[1], (p0, 1), input_channels * 25),
        "conv2_w": prep_conv(conv2_w),
        "conv2_b": uinit(ks[3], (p1, 1), p0 * 25),
        "conv3_w": prep_conv(conv3_w),
        "conv3_b": uinit(ks[5], (p2, 1), p1 * 9),
        # fc weight pre-split per spatial position s = r*sf + c: (sf*sf, p3, p2)
        "fc_w": fc_w.reshape(p3, p2, sf * sf).transpose(2, 0, 1),
        "fc_b": uinit(ks[7], (p3, 1), out_numel),
        "cls_w": jnp.zeros((6, p3), jnp.float32),                 # weight.fill_(0)
        "cls_b": jnp.array([[1.], [0.], [0.], [0.], [1.], [0.]],  # identity bias
                           jnp.float32),
    }


# --------------------------------------------------------------------------
# Forward
# --------------------------------------------------------------------------

def stn_forward(prm, x):
    N, C, H, W = x.shape
    assert H == W, "stn assumes square inputs"
    x_flat = x.reshape(N, C, H * W)
    theta_t = _localization(prm, x_flat, N, H)          # (6, N), Pallas kernel #1
    out = affine_grid_sample(x_flat, theta_t, N, C, H, W)  # Pallas kernel #2
    return out.reshape(N, C, H, W)


if __name__ == "__main__":
    input_channels, input_size = 4, 16
    params = (8, 8, 8, 32)

    key = jax.random.PRNGKey(0)
    kx, kp = jax.random.split(key)
    x = jax.random.normal(kx, (2, input_channels, input_size, input_size),
                          dtype=jnp.float32)
    prm = init_stn_params(kp, input_channels, input_size, params)

    _probe_roll()   # resolve pltpu.roll direction before building the kernels
    out = jax.jit(stn_forward)(prm, x)
    jax.block_until_ready(out)

    assert out.shape == x.shape and out.dtype == jnp.float32
    # With the zero-initialised classifier weights theta is exactly the identity
    # transform, so grid_sample must reproduce the input.
    assert bool(jnp.allclose(out, x, atol=1e-4)), "identity-theta grid_sample mismatch"
    print("KERNEL_OK")
</pallas_src>

<mosaic_0001>
module attributes {stable_mosaic.version = 11 : i64} {
  func.func @_k(%arg0: i32, %arg1: memref<8x128xf32, #tpu.memory_space<vmem>>, %arg2: memref<8x128xf32, #tpu.memory_space<vmem>>) attributes {dimension_semantics = [#tpu.dimension_semantics<arbitrary>], iteration_bounds = array<i64: 1>, scalar_prefetch = 0 : i64, scratch_operands = 0 : i64, tpu.core_type = #tpu.core_type<tc>, window_params = [{pipeline_mode = #tpu.pipeline_mode<synchronous>, transform_indices = @transform_0, window_bounds = array<i64: 8, 128>}, {pipeline_mode = #tpu.pipeline_mode<synchronous>, transform_indices = @transform_1, window_bounds = array<i64: 8, 128>}]} {
    %c0 = arith.constant 0 : index
    %c0_0 = arith.constant 0 : index
    %0 = vector.load %arg1[%c0, %c0_0] : memref<8x128xf32, #tpu.memory_space<vmem>>, vector<8x128xf32>
    %c1_i32 = arith.constant 1 : i32
    %1 = tpu.dynamic_rotate %0 by %c1_i32 dim 1 : vector<8x128xf32>, i32 -> vector<8x128xf32>
    %c0_1 = arith.constant 0 : index
    %c0_2 = arith.constant 0 : index
    %2 = vector.load %arg2[%c0_1, %c0_2] : memref<8x128xf32, #tpu.memory_space<vmem>>, vector<8x128xf32>
    tpu.vector_store %arg2[%c0_1, %c0_2], %1 {strides = array<i32>} : memref<8x128xf32, #tpu.memory_space<vmem>>, vector<8x128xf32>,
    return
  }
  func.func @transform_0(%arg0: i32) -> (i32, i32) {
    %c0_i32 = arith.constant 0 : i32
    %c0_i32_0 = arith.constant 0 : i32
    %c0_i32_1 = arith.constant 0 : i32
    return %c0_i32, %c0_i32_0 : i32, i32
  }
  func.func @transform_1(%arg0: i32) -> (i32, i32) {
    %c0_i32 = arith.constant 0 : i32
    %c0_i32_0 = arith.constant 0 : i32
    %c0_i32_1 = arith.constant 0 : i32
    return %c0_i32, %c0_i32_0 : i32, i32
  }
}

</mosaic_0001>

<llo_original>
// kernel: tpu_custom_call.1
$region0: #{tpu_custom_call.1}
  #allocation0 [shape = 'u32[]', space=smem, size = 0x4, offset = 0x4, fixed_abs, tag = 'smem constant byte address 0x4 - core index']
  #allocation1 [shape = 'u32[72,128]{1,0:T(1,128)}', space=vmem, size = 0x9000, scoped, tag = 'internal scratch']
  %s0 = inlined_call_operand.hbm [shape: f32[8,128], index: 0, kind: input, shape index: {}]
  %s1 = inlined_call_operand.hbm [shape: f32[8,128], index: 1, kind: output, shape index: {}]
  %s2 = sld [smem:[#allocation0]]
  $region18: #{tpu_custom_call.1} parent=0
    _
  %s4 = ssub.s32 1, %s2
  %s5 = scalar_select 0, %s4, %s2
  $region1: #{tpu_custom_call.1} parent=0
    #allocation2 [shape = 'u8[4096]{0}', space=vmem, size = 0x1000, scoped, tag = 'input window, operand 0, single buffered']
    #allocation3 [shape = 's32[1]{0}', space=sflag, size = 0x4, scoped, tag = 'scoped memory for tpu_custom_call.1']
    #allocation4 [shape = 's32[1]{0}', space=sflag, size = 0x4, scoped, tag = 'scoped memory for tpu_custom_call.1']
    #allocation5 [shape = 'u8[4096]{0}', space=vmem, size = 0x1000, scoped, tag = 'output window, operand 0, single buffered']
    %6 = vsyncpa [#allocation3], 0
    %7 = vsyncpa [#allocation4], 0
    // Predicated region
    $region2: #{tpu_custom_call.1} parent=1 // pred_check
      _
    $region3: #{tpu_custom_call.1} parent=1 // pred_check_branch
      %9 = sbr.rel (0) target = $region5
    $region4: #{tpu_custom_call.1} parent=1 // pred_region
      %11 = vsyncadd [#allocation3], 0
      %s13 = sshll.u32 %s0, 4
      %s14 = int_to_ptr.hbm [resolvable:$true] %s13
      %s15 = sshll.u32 [#allocation2], 4
      %s16 = int_to_ptr.vmem [resolvable:$true] %s15
      %18 = dma.hbm_to_vmem [thread:$0]  %s14, 128, %s16, [#allocation3]
    $region5: #{tpu_custom_call.1} parent=1 // pred_fallthru
      _
    // Predicated region
    $region6: #{tpu_custom_call.1} parent=1 // pred_check
      _
    $region7: #{tpu_custom_call.1} parent=1 // pred_check_branch
      %20 = sbr.rel (0) target = $region9
    $region8: #{tpu_custom_call.1} parent=1 // pred_region
      %22 = dma.done [#allocation3], 128
    $region9: #{tpu_custom_call.1} parent=1 // pred_fallthru
      _
    %v23 = vld [vmem:[#allocation2] sm:$0xff]
    %24 = vrot.lane.b32.xlu0 %v23, 1
    %v25 = vpop.permute.xlu0 %24
    %26 = vst [vmem:[#allocation5] sm:$0xff] %v25
    // Predicated region
    $region10: #{tpu_custom_call.1} parent=1 // pred_check
      _
    $region11: #{tpu_custom_call.1} parent=1 // pred_check_branch
      %28 = sbr.rel (0) target = $region13
    $region12: #{tpu_custom_call.1} parent=1 // pred_region
      %30 = vsyncadd [#allocation4], 0
      %s32 = sshll.u32 [#allocation5], 4
      %s33 = int_to_ptr.vmem [resolvable:$true] %s32
      %s34 = sshll.u32 %s1, 4
      %s35 = int_to_ptr.hbm [resolvable:$true] %s34
      %37 = dma.vmem_to_hbm [thread:$0]  %s33, 128, %s35, [#allocation4]
    $region13: #{tpu_custom_call.1} parent=1 // pred_fallthru
      _
    // Predicated region
    $region14: #{tpu_custom_call.1} parent=1 // pred_check
      _
    $region15: #{tpu_custom_call.1} parent=1 // pred_check_branch
      %39 = sbr.rel (0) target = $region17
    $region16: #{tpu_custom_call.1} parent=1 // pred_region
      %41 = dma.done [#allocation4], 128
    $region17: #{tpu_custom_call.1} parent=1 // pred_fallthru
      _
    %42 = vsyncpa [#allocation3], 1
    %43 = vsyncpa [#allocation4], 1

</llo_original>
